<compile_context>
chip_gen: v7x
topology: tpu7x:2x2x1
jax: 0.10.0
libtpu: 0.0.40
codegen_flags: <defaults>
</compile_context>

<pallas_src>
import jax
import jax.numpy as jnp
from jax.experimental import pallas as pl
from jax.experimental.pallas import tpu as pltpu


def singleprop_kernel(oh_bd_ref, ew_ref, adj_ref, bconv_ref,
                      pool_ref, wevt_ref, bevt_ref, out_ref):
    # (1) per-block transformed node features in ONE MXU push:
    #     tf[r*Np + j, :] = onehot[j] @ (emb @ W_r)   for r < R
    #     tf[R*Np + j, :] = onehot[j] @ (emb @ W_root)
    tf = jnp.dot(oh_bd_ref[...], ew_ref[...],
                 preferred_element_type=jnp.float32)                 # [(R+1)*Np, H]

    # (2) RGCN mean-aggregation + root term as ONE contraction (no serial r-loop):
    #     conv[i] = sum_r adj_norm[r, i, :] @ tf_block_r + tf_block_root[i]
    conv = jnp.dot(adj_ref[...], tf.astype(jnp.bfloat16),
                   preferred_element_type=jnp.float32)               # [Np, H]

    h = jnp.maximum(conv + bconv_ref[...], 0.0)                      # ReLU

    # (3) per-graph mean over event nodes as a matmul with the pooling matrix.
    g_i = jnp.dot(pool_ref[...], h.astype(jnp.bfloat16),
                  preferred_element_type=jnp.float32)                # [G, H]

    # (4) event_lin
    out = jnp.dot(g_i.astype(jnp.bfloat16), wevt_ref[...],
                  preferred_element_type=jnp.float32) + bevt_ref[...]  # [G, C]
    out_ref[...] = out.astype(out_ref.dtype)


def singleprop_forward(oh_bd, ew_ext, adj_ext, bconv, pool, wevt_t, bevt):
    G = pool.shape[0]
    C = wevt_t.shape[1]
    full = lambda a: pl.BlockSpec(a.shape, lambda i, nd=a.ndim: (0,) * nd)
    args = (oh_bd, ew_ext, adj_ext, bconv, pool, wevt_t, bevt)
    return pl.pallas_call(
        singleprop_kernel,
        out_shape=jax.ShapeDtypeStruct((G, C), jnp.float32),
        grid=(1,),
        in_specs=[full(a) for a in args],
        out_specs=pl.BlockSpec((G, C), lambda i: (0, 0)),
        compiler_params=pltpu.CompilerParams(
            dimension_semantics=("arbitrary",)),
    )(*args)


if __name__ == "__main__":
    # ---- hyperparameters (small, consistent with the module) ----
    num_event_types = 5
    num_entity_types = 3
    num_rels = 4
    hidden_channels = 32
    embedding_dim = 16
    num_cls = num_event_types - 1
    V = num_event_types + num_entity_types

    # ---- synthetic batched graph (2 graphs, 12 nodes, 20 edges) ----
    N, E, G = 12, 20, 2
    Np = 16  # node dim padded to a sublane multiple

    key = jax.random.PRNGKey(0)
    (k_emb, k_wrel, k_wroot, k_bconv, k_wevt, k_bevt,
     k_x, k_src, k_dst, k_rel) = jax.random.split(key, 10)

    node_is_event = jnp.array([1, 1, 0, 0, 1, 0,    # graph 0 (nodes 0..5)
                               1, 1, 1, 0, 0, 0],   # graph 1 (nodes 6..11)
                              dtype=jnp.int32)      # 1 = event node (node_type == 0)
    batch = jnp.array([0, 0, 0, 0, 0, 0, 1, 1, 1, 1, 1, 1], dtype=jnp.int32)
    x_idx = jnp.where(
        node_is_event == 1,
        jax.random.randint(k_x, (N,), 0, num_event_types),
        jax.random.randint(k_x, (N,), num_event_types, V),
    ).astype(jnp.int32)

    src = jax.random.randint(k_src, (E,), 0, N).astype(jnp.int32)
    dst = jax.random.randint(k_dst, (E,), 0, N).astype(jnp.int32)
    edge_type = jax.random.randint(k_rel, (E,), 0, num_rels).astype(jnp.int32)

    # ---- deterministic parameter init (shapes from __init__) ----
    node_emb = jax.random.normal(k_emb, (V, embedding_dim), jnp.float32)
    w_rel = jax.random.normal(k_wrel, (num_rels, embedding_dim, hidden_channels),
                              jnp.float32) * 0.1
    w_root = jax.random.normal(k_wroot, (embedding_dim, hidden_channels),
                               jnp.float32) * 0.1
    b_conv = jax.random.normal(k_bconv, (1, hidden_channels), jnp.float32) * 0.1
    w_evt = jax.random.normal(k_wevt, (num_cls, hidden_channels), jnp.float32) * 0.1
    b_evt = jax.random.normal(k_bevt, (1, num_cls), jnp.float32) * 0.1
    # rel_emb / rel_lin are unused in forward(); not materialized.

    # ---- glue: one-hot, normalized per-relation adjacency, event pooling ----
    onehot = jax.nn.one_hot(x_idx, V, dtype=jnp.float32)              # [N, V]

    adj = jnp.zeros((num_rels, N, N), jnp.float32)
    adj = adj.at[edge_type, dst, src].add(1.0)                        # message src -> dst
    deg = adj.sum(axis=-1, keepdims=True)
    adj = adj / jnp.maximum(deg, 1.0)                                 # mean aggregation

    is_event = (node_is_event == 1).astype(jnp.float32)
    pool = jax.nn.one_hot(batch, G, dtype=jnp.float32).T * is_event[None, :]
    pool = pool / jnp.maximum(pool.sum(axis=-1, keepdims=True), 1.0)  # per-graph mean

    # ---- pad node dim and build the fused (batched) operands ----
    onehot_p = jnp.zeros((Np, V), jnp.float32).at[:N, :].set(onehot)
    adj_p = jnp.zeros((num_rels, Np, Np), jnp.float32).at[:, :N, :N].set(adj)
    pool_p = jnp.zeros((G, Np), jnp.float32).at[:, :N].set(pool)

    RB = num_rels + 1
    # block-diagonal one-hot: (R+1) copies of onehot on the diagonal
    oh_bd = jnp.kron(jnp.eye(RB, dtype=jnp.float32), onehot_p)        # [(R+1)Np, (R+1)V]
    # emb folded into relation + root weights, stacked per block (weight-only products)
    ew_rel = jnp.einsum('vd,rdh->rvh', node_emb, w_rel).reshape(
        num_rels * V, hidden_channels)
    ew_ext = jnp.concatenate([ew_rel, node_emb @ w_root], axis=0)     # [(R+1)V, H]
    # normalized adjacency laid out 'rij -> i (r j)', plus identity block for the root term
    adj_wide = jnp.transpose(adj_p, (1, 0, 2)).reshape(Np, num_rels * Np)
    adj_ext = jnp.concatenate([adj_wide, jnp.eye(Np, dtype=jnp.float32)],
                              axis=1)                                 # [Np, (R+1)Np]

    bf = jnp.bfloat16
    out = singleprop_forward(oh_bd.astype(bf), ew_ext.astype(bf), adj_ext.astype(bf),
                             b_conv, pool_p.astype(bf), w_evt.T.astype(bf), b_evt)
    out = jax.block_until_ready(out)

    # ---- f32 reference (original unfolded RGCN formulation) ----
    feat = onehot @ node_emb
    acc = feat @ w_root
    for r in range(num_rels):
        acc = acc + (adj[r] @ feat) @ w_rel[r]
    h_ref = jnp.maximum(acc + b_conv, 0.0)
    ref = (pool @ h_ref) @ w_evt.T + b_evt

    assert out.shape == (G, num_cls)
    # bf16 MXU operands -> tolerance loosened per review (~1e-2 relative expected)
    assert jnp.allclose(out, ref, atol=3e-2, rtol=3e-2), "mismatch vs JAX reference"

    print("KERNEL_OK")
</pallas_src>

<mosaic_0001>
module attributes {stable_mosaic.version = 11 : i64} {
  func.func @singleprop_kernel(%arg0: i32, %arg1: memref<80x40xbf16, #tpu.memory_space<vmem>>, %arg2: memref<40x32xbf16, #tpu.memory_space<vmem>>, %arg3: memref<16x80xbf16, #tpu.memory_space<vmem>>, %arg4: memref<1x32xf32, #tpu.memory_space<vmem>>, %arg5: memref<2x16xbf16, #tpu.memory_space<vmem>>, %arg6: memref<32x4xbf16, #tpu.memory_space<vmem>>, %arg7: memref<1x4xf32, #tpu.memory_space<vmem>>, %arg8: memref<2x4xf32, #tpu.memory_space<vmem>>) attributes {dimension_semantics = [#tpu.dimension_semantics<arbitrary>], iteration_bounds = array<i64: 1>, scalar_prefetch = 0 : i64, scratch_operands = 0 : i64, tpu.core_type = #tpu.core_type<tc>, window_params = [{pipeline_mode = #tpu.pipeline_mode<synchronous>, transform_indices = @transform_0, window_bounds = array<i64: 80, 40>}, {pipeline_mode = #tpu.pipeline_mode<synchronous>, transform_indices = @transform_1, window_bounds = array<i64: 40, 32>}, {pipeline_mode = #tpu.pipeline_mode<synchronous>, transform_indices = @transform_2, window_bounds = array<i64: 16, 80>}, {pipeline_mode = #tpu.pipeline_mode<synchronous>, transform_indices = @transform_3, window_bounds = array<i64: 1, 32>}, {pipeline_mode = #tpu.pipeline_mode<synchronous>, transform_indices = @transform_4, window_bounds = array<i64: 2, 16>}, {pipeline_mode = #tpu.pipeline_mode<synchronous>, transform_indices = @transform_5, window_bounds = array<i64: 32, 4>}, {pipeline_mode = #tpu.pipeline_mode<synchronous>, transform_indices = @transform_6, window_bounds = array<i64: 1, 4>}, {pipeline_mode = #tpu.pipeline_mode<synchronous>, transform_indices = @transform_7, window_bounds = array<i64: 2, 4>}]} {
    %c0 = arith.constant 0 : index
    %c0_0 = arith.constant 0 : index
    %0 = vector.load %arg1[%c0, %c0_0] : memref<80x40xbf16, #tpu.memory_space<vmem>>, vector<80x40xbf16>
    %c0_1 = arith.constant 0 : index
    %c0_2 = arith.constant 0 : index
    %1 = vector.load %arg2[%c0_1, %c0_2] : memref<40x32xbf16, #tpu.memory_space<vmem>>, vector<40x32xbf16>
    %cst = arith.constant dense<0.000000e+00> : vector<80x32xf32>
    %2 = tpu.matmul %0, %1, %cst {dimension_numbers = #tpu.dot_dimension_numbers<[1], [0], [0], [1], [0, 0, 1, 1], [], []>} : vector<80x40xbf16>, vector<40x32xbf16>, vector<80x32xf32> -> vector<80x32xf32>
    %c0_3 = arith.constant 0 : index
    %c0_4 = arith.constant 0 : index
    %3 = vector.load %arg3[%c0_3, %c0_4] : memref<16x80xbf16, #tpu.memory_space<vmem>>, vector<16x80xbf16>
    %4 = arith.truncf %2 : vector<80x32xf32> to vector<80x32xbf16>
    %cst_5 = arith.constant dense<0.000000e+00> : vector<16x32xf32>
    %5 = tpu.matmul %3, %4, %cst_5 {dimension_numbers = #tpu.dot_dimension_numbers<[1], [0], [0], [1], [0, 0, 1, 1], [], []>} : vector<16x80xbf16>, vector<80x32xbf16>, vector<16x32xf32> -> vector<16x32xf32>
    %c0_6 = arith.constant 0 : index
    %c0_7 = arith.constant 0 : index
    %6 = vector.load %arg4[%c0_6, %c0_7] : memref<1x32xf32, #tpu.memory_space<vmem>>, vector<1x32xf32>
    %7 = vector.broadcast %6 : vector<1x32xf32> to vector<16x32xf32>
    %8 = arith.addf %5, %7 : vector<16x32xf32>
    %cst_8 = arith.constant 0.000000e+00 : f32
    %9 = vector.broadcast %cst_8 : f32 to vector<16x32xf32>
    %10 = arith.maximumf %8, %9 : vector<16x32xf32>
    %c0_9 = arith.constant 0 : index
    %c0_10 = arith.constant 0 : index
    %11 = vector.load %arg5[%c0_9, %c0_10] : memref<2x16xbf16, #tpu.memory_space<vmem>>, vector<2x16xbf16>
    %12 = arith.truncf %10 : vector<16x32xf32> to vector<16x32xbf16>
    %cst_11 = arith.constant dense<0.000000e+00> : vector<2x32xf32>
    %13 = tpu.matmul %11, %12, %cst_11 {dimension_numbers = #tpu.dot_dimension_numbers<[1], [0], [0], [1], [0, 0, 1, 1], [], []>} : vector<2x16xbf16>, vector<16x32xbf16>, vector<2x32xf32> -> vector<2x32xf32>
    %14 = arith.truncf %13 : vector<2x32xf32> to vector<2x32xbf16>
    %c0_12 = arith.constant 0 : index
    %c0_13 = arith.constant 0 : index
    %15 = vector.load %arg6[%c0_12, %c0_13] : memref<32x4xbf16, #tpu.memory_space<vmem>>, vector<32x4xbf16>
    %cst_14 = arith.constant dense<0.000000e+00> : vector<2x4xf32>
    %16 = tpu.matmul %14, %15, %cst_14 {dimension_numbers = #tpu.dot_dimension_numbers<[1], [0], [0], [1], [0, 0, 1, 1], [], []>} : vector<2x32xbf16>, vector<32x4xbf16>, vector<2x4xf32> -> vector<2x4xf32>
    %c0_15 = arith.constant 0 : index
    %c0_16 = arith.constant 0 : index
    %17 = vector.load %arg7[%c0_15, %c0_16] : memref<1x4xf32, #tpu.memory_space<vmem>>, vector<1x4xf32>
    %18 = vector.broadcast %17 : vector<1x4xf32> to vector<2x4xf32>
    %19 = arith.addf %16, %18 : vector<2x4xf32>
    %c0_17 = arith.constant 0 : index
    %c0_18 = arith.constant 0 : index
    %20 = vector.load %arg8[%c0_17, %c0_18] : memref<2x4xf32, #tpu.memory_space<vmem>>, vector<2x4xf32>
    tpu.vector_store %arg8[%c0_17, %c0_18], %19 {strides = array<i32>} : memref<2x4xf32, #tpu.memory_space<vmem>>, vector<2x4xf32>,
    return
  }
  func.func @transform_0(%arg0: i32) -> (i32, i32) {
    %c0_i32 = arith.constant 0 : i32
    %c0_i32_0 = arith.constant 0 : i32
    %c0_i32_1 = arith.constant 0 : i32
    return %c0_i32, %c0_i32_0 : i32, i32
  }
  func.func @transform_1(%arg0: i32) -> (i32, i32) {
    %c0_i32 = arith.constant 0 : i32
    %c0_i32_0 = arith.constant 0 : i32
    %c0_i32_1 = arith.constant 0 : i32
    return %c0_i32, %c0_i32_0 : i32, i32
  }
  func.func @transform_2(%arg0: i32) -> (i32, i32) {
    %c0_i32 = arith.constant 0 : i32
    %c0_i32_0 = arith.constant 0 : i32
    %c0_i32_1 = arith.constant 0 : i32
    return %c0_i32, %c0_i32_0 : i32, i32
  }
  func.func @transform_3(%arg0: i32) -> (i32, i32) {
    %c0_i32 = arith.constant 0 : i32
    %c0_i32_0 = arith.constant 0 : i32
    %c0_i32_1 = arith.constant 0 : i32
    return %c0_i32, %c0_i32_0 : i32, i32
  }
  func.func @transform_4(%arg0: i32) -> (i32, i32) {
    %c0_i32 = arith.constant 0 : i32
    %c0_i32_0 = arith.constant 0 : i32
    %c0_i32_1 = arith.constant 0 : i32
    return %c0_i32, %c0_i32_0 : i32, i32
  }
  func.func @transform_5(%arg0: i32) -> (i32, i32) {
    %c0_i32 = arith.constant 0 : i32
    %c0_i32_0 = arith.constant 0 : i32
    %c0_i32_1 = arith.constant 0 : i32
    return %c0_i32, %c0_i32_0 : i32, i32
  }
  func.func @transform_6(%arg0: i32) -> (i32, i32) {
    %c0_i32 = arith.constant 0 : i32
    %c0_i32_0 = arith.constant 0 : i32
    %c0_i32_1 = arith.constant 0 : i32
    return %c0_i32, %c0_i32_0 : i32, i32
  }
  func.func @transform_7(%arg0: i32) -> (i32, i32) {
    %c0_i32 = arith.constant 0 : i32
    %c0_i32_0 = arith.constant 0 : i32
    %c0_i32_1 = arith.constant 0 : i32
    return %c0_i32, %c0_i32_0 : i32, i32
  }
}

</mosaic_0001>

<llo_original>
// kernel: tpu_custom_call.1
$region0: #{tpu_custom_call.1}
  #allocation0 [shape = 'u32[]', space=smem, size = 0x4, offset = 0x4, fixed_abs, tag = 'smem constant byte address 0x4 - core index']
  #allocation1 [shape = 'u32[144,128]{1,0:T(1,128)}', space=vmem, size = 0x12000, scoped, tag = 'internal scratch']
  %s0 = inlined_call_operand.vmem [shape: bf16[80,40], index: 0, kind: input, shape index: {}]
  %s1 = inlined_call_operand.vmem [shape: bf16[40,32], index: 1, kind: input, shape index: {}]
  %s2 = inlined_call_operand.vmem [shape: bf16[16,80], index: 2, kind: input, shape index: {}]
  %s3 = inlined_call_operand.vmem [shape: f32[1,32], index: 3, kind: input, shape index: {}]
  %s4 = inlined_call_operand.vmem [shape: bf16[2,16], index: 4, kind: input, shape index: {}]
  %s5 = inlined_call_operand.vmem [shape: bf16[32,4], index: 5, kind: input, shape index: {}]
  %s6 = inlined_call_operand.vmem [shape: f32[1,4], index: 6, kind: input, shape index: {}]
  %s7 = inlined_call_operand.hbm [shape: f32[2,4], index: 7, kind: output, shape index: {}]
  %s8 = sld [smem:[#allocation0]]
  $region38: #{tpu_custom_call.1} parent=0
    _
  %s10 = ssub.s32 1, %s8
  %s11 = scalar_select 0, %s10, %s8
  $region1: #{tpu_custom_call.1} parent=0
    #allocation2 [shape = 'u8[1024]{0}', space=vmem, size = 0x400, scoped, tag = 'output window, operand 0, single buffered']
    #allocation3 [shape = 's32[1]{0}', space=sflag, size = 0x4, scoped, tag = 'scoped memory for tpu_custom_call.1']
    %12 = vsyncpa [#allocation3], 0
    // Predicated region
    $region2: #{tpu_custom_call.1} parent=1 // pred_check
      _
    $region3: #{tpu_custom_call.1} parent=1 // pred_check_branch
      %14 = sbr.rel (0) target = $region5
    $region4: #{tpu_custom_call.1} parent=1 // pred_region
      _
    $region5: #{tpu_custom_call.1} parent=1 // pred_fallthru
      _
    // Predicated region
    $region6: #{tpu_custom_call.1} parent=1 // pred_check
      _
    $region7: #{tpu_custom_call.1} parent=1 // pred_check_branch
      %16 = sbr.rel (0) target = $region9
    $region8: #{tpu_custom_call.1} parent=1 // pred_region
      _
    $region9: #{tpu_custom_call.1} parent=1 // pred_fallthru
      _
    // Predicated region
    $region10: #{tpu_custom_call.1} parent=1 // pred_check
      _
    $region11: #{tpu_custom_call.1} parent=1 // pred_check_branch
      %18 = sbr.rel (0) target = $region13
    $region12: #{tpu_custom_call.1} parent=1 // pred_region
      _
    $region13: #{tpu_custom_call.1} parent=1 // pred_fallthru
      _
    // Predicated region
    $region14: #{tpu_custom_call.1} parent=1 // pred_check
      _
    $region15: #{tpu_custom_call.1} parent=1 // pred_check_branch
      %20 = sbr.rel (0) target = $region17
    $region16: #{tpu_custom_call.1} parent=1 // pred_region
      _
    $region17: #{tpu_custom_call.1} parent=1 // pred_fallthru
      _
    // Predicated region
    $region18: #{tpu_custom_call.1} parent=1 // pred_check
      _
    $region19: #{tpu_custom_call.1} parent=1 // pred_check_branch
      %22 = sbr.rel (0) target = $region21
    $region20: #{tpu_custom_call.1} parent=1 // pred_region
      _
    $region21: #{tpu_custom_call.1} parent=1 // pred_fallthru
      _
    // Predicated region
    $region22: #{tpu_custom_call.1} parent=1 // pred_check
      _
    $region23: #{tpu_custom_call.1} parent=1 // pred_check_branch
      %24 = sbr.rel (0) target = $region25
    $region24: #{tpu_custom_call.1} parent=1 // pred_region
      _
    $region25: #{tpu_custom_call.1} parent=1 // pred_fallthru
      _
    // Predicated region
    $region26: #{tpu_custom_call.1} parent=1 // pred_check
      _
    $region27: #{tpu_custom_call.1} parent=1 // pred_check_branch
      %26 = sbr.rel (0) target = $region29
    $region28: #{tpu_custom_call.1} parent=1 // pred_region
      _
    $region29: #{tpu_custom_call.1} parent=1 // pred_fallthru
      _
    %v28 = vld [vmem:[%s0] sm:$0xf]
    %v29 = vld [vmem:[%s0 + $0x4] sm:$0xf]
    %v30 = vld [vmem:[%s0 + $0x8] sm:$0xf]
    %v31 = vld [vmem:[%s0 + $0xc] sm:$0xf]
    %v32 = vld [vmem:[%s0 + $0x10] sm:$0xf]
    %v33 = vld [vmem:[%s0 + $0x14] sm:$0xf]
    %v34 = vld [vmem:[%s0 + $0x18] sm:$0xf]
    %v35 = vld [vmem:[%s0 + $0x1c] sm:$0xf]
    %v36 = vld [vmem:[%s0 + $0x20] sm:$0xf]
    %v37 = vld [vmem:[%s0 + $0x24] sm:$0xf]
    %v38 = vld [vmem:[%s1] sm:$0xf]
    %v39 = vld [vmem:[%s1 + $0x4] sm:$0xf]
    %v40 = vld [vmem:[%s1 + $0x8] sm:$0xf]
    %v41 = vld [vmem:[%s1 + $0xc] sm:$0xf]
    %v42 = vld [vmem:[%s1 + $0x10] sm:$0xf]
    %v53 = vunpack.c.l.b16 %v28
    %v54 = vunpack.c.l.b16 %v29
    %v55 = vunpack.c.l.b16 %v30
    %v56 = vunpack.c.l.b16 %v31
    %v57 = vunpack.c.l.b16 %v32
    %v58 = vunpack.c.l.b16 %v33
    %v59 = vunpack.c.l.b16 %v34
    %v60 = vunpack.c.l.b16 %v35
    %v61 = vunpack.c.l.b16 %v36
    %v62 = vunpack.c.l.b16 %v37
    %v63 = vpack.c.b16 %v54, %v53
    %v64 = vpack.c.b16 %v56, %v55
    %v65 = vpack.c.b16 %v58, %v57
    %v66 = vpack.c.b16 %v60, %v59
    %v67 = vpack.c.b16 %v62, %v61
    %v73 = vunpack.c.l.b16 %v38
    %v74 = vunpack.c.l.b16 %v39
    %v75 = vunpack.c.l.b16 %v40
    %v76 = vunpack.c.l.b16 %v41
    %v77 = vunpack.c.l.b16 %v42
    %v78 = vpack.c.b16 %v74, %v73
    %v79 = vpack.c.b16 %v76, %v75
    %v80 = vpack.c.b16 %v77, %v77
    %vm83 = vcmask 326656
    %v85 = vsel %vm83, %v63, 0
    %v88 = vsel %vm83, %v64, 0
    %v91 = vsel %vm83, %v65, 0
    %v94 = vsel %vm83, %v66, 0
    %v97 = vsel %vm83, %v67, 0
    %vm99 = vcmask 1043456
    %v101 = vsel %vm99, %v80, 0
    %103 = vmatprep.subr.bf16.mxu0 0
    %104 = vmatpush1.bf16.msra.mxu0 %v78
    %105 = vmatprep.subr.bf16.mxu0 0
    %106 = vmatpush1.bf16.msra.mxu0 %v79
    %107 = vmatprep.subr.bf16.mxu0 0
    %108 = vmatpush1.bf16.msra.mxu0 %v101
    %109 = vmatprep.subr.bf16.mxu0 0
    %110 = vmatpush1.bf16.msra.mxu0 0
    %111 = vmatprep.subr.bf16.mxu0 0
    %112 = vmatpush1.bf16.msra.mxu0 0
    %113 = vmatprep.subr.bf16.mxu0 0
    %114 = vmatpush1.bf16.msra.mxu0 0
    %115 = vmatprep.subr.bf16.mxu0 0
    %116 = vmatpush1.bf16.msra.mxu0 0
    %117 = vmatprep.subr.bf16.mxu0 0
    %118 = vmatpush1.bf16.msra.mxu0 0
    %119 = vmatprep.subr.bf16.mxu0 0
    %120 = vmatpush1.bf16.msra.mxu0 0
    %121 = vmatprep.subr.bf16.mxu0 0
    %122 = vmatpush1.bf16.msra.mxu0 0
    %123 = vmatprep.subr.bf16.mxu0 0
    %124 = vmatpush1.bf16.msra.mxu0 0
    %125 = vmatprep.subr.bf16.mxu0 0
    %126 = vmatpush1.bf16.msra.mxu0 0
    %127 = vmatprep.subr.bf16.mxu0 0
    %128 = vmatpush1.bf16.msra.mxu0 0
    %129 = vmatprep.subr.bf16.mxu0 0
    %130 = vmatpush1.bf16.msra.mxu0 0
    %131 = vmatprep.subr.bf16.mxu0 0
    %132 = vmatpush1.bf16.msra.mxu0 0
    %133 = vmatprep.subr.bf16.mxu0 0
    %134 = vmatpush1.bf16.msra.mxu0 0
    %135 = vmatprep.mubr.bf16.mxu0 0
    %136 = vmatmul.mubr.bf16.gmra.mrb[0].mxu0 %v85
    %v137 = vpop.f32.mrb[0].mxu0
    %v138 = vadd.f32 0.0, %v137
    %v139 = vpop.f32.mrb[0].mxu0
    %v140 = vpop.f32.mrb[0].mxu0
    %v141 = vadd.f32 0.0, %v140
    %v142 = vpop.f32.mrb[0].mxu0
    %143 = vmatprep.mubr.bf16.mxu0 0
    %144 = vmatmul.mubr.bf16.gmra.mrb[0].mxu0 %v88
    %v145 = vpop.f32.mrb[0].mxu0
    %v146 = vadd.f32 0.0, %v145
    %v147 = vpop.f32.mrb[0].mxu0
    %v148 = vpop.f32.mrb[0].mxu0
    %v149 = vadd.f32 0.0, %v148
    %v150 = vpop.f32.mrb[0].mxu0
    %151 = vmatprep.mubr.bf16.mxu0 0
    %152 = vmatmul.mubr.bf16.gmra.mrb[0].mxu0 %v91
    %v153 = vpop.f32.mrb[0].mxu0
    %v154 = vadd.f32 0.0, %v153
    %v155 = vpop.f32.mrb[0].mxu0
    %v156 = vpop.f32.mrb[0].mxu0
    %v157 = vadd.f32 0.0, %v156
    %v158 = vpop.f32.mrb[0].mxu0
    %159 = vmatprep.mubr.bf16.mxu0 0
    %160 = vmatmul.mubr.bf16.gmra.mrb[0].mxu0 %v94
    %v161 = vpop.f32.mrb[0].mxu0
    %v162 = vadd.f32 0.0, %v161
    %v163 = vpop.f32.mrb[0].mxu0
    %v164 = vpop.f32.mrb[0].mxu0
    %v165 = vadd.f32 0.0, %v164
    %v166 = vpop.f32.mrb[0].mxu0
    %167 = vmatprep.mubr.bf16.mxu0 0
    %168 = vmatmul.mubr.bf16.gmra.mrb[0].mxu0 %v97
    %v169 = vpop.f32.mrb[0].mxu0
    %v170 = vadd.f32 0.0, %v169
    %v171 = vpop.f32.mrb[0].mxu0
    %v172 = vpop.f32.mrb[0].mxu0
    %v173 = vadd.f32 0.0, %v172
    %v174 = vpop.f32.mrb[0].mxu0
    %175 = vdwg.mxu0
    %v176 = vld [vmem:[%s2] sm:$0xf]
    %v177 = vld [vmem:[%s2 + $0x4] sm:$0xf]
    %v178 = vpack.c.bf16 %v141, %v138
    %v179 = vpack.c.bf16 %v149, %v146
    %v180 = vpack.c.bf16 %v157, %v154
    %v181 = vpack.c.bf16 %v165, %v162
    %v182 = vpack.c.bf16 %v173, %v170
    %v183 = vld [vmem:[%s3] sm:$0x1]
    %v185 = vlaneseq
    %v186 = vshrl.u32 %v185, 7
    %v187 = vsub.s32 0, %v186
    %v188 = vrot.slane %v183, %v187
    %v192 = vunpack.c.l.b16 %v176
    %v193 = vunpack.c.l.b16 %v177
    %v194 = vpack.c.b16 %v193, %v192
    %vm195 = vcmask 654336
    %v197 = vsel %vm195, %v194, 0
    %199 = vmatprep.subr.bf16.mxu0 0
    %200 = vmatpush1.bf16.msra.mxu0 %v178
    %201 = vmatprep.subr.bf16.mxu0 0
    %202 = vmatpush1.bf16.msra.mxu0 %v179
    %203 = vmatprep.subr.bf16.mxu0 0
    %204 = vmatpush1.bf16.msra.mxu0 %v180
    %205 = vmatprep.subr.bf16.mxu0 0
    %206 = vmatpush1.bf16.msra.mxu0 %v181
    %207 = vmatprep.subr.bf16.mxu0 0
    %208 = vmatpush1.bf16.msra.mxu0 %v182
    %209 = vmatprep.subr.bf16.mxu0 0
    %210 = vmatpush1.bf16.msra.mxu0 0
    %211 = vmatprep.subr.bf16.mxu0 0
    %212 = vmatpush1.bf16.msra.mxu0 0
    %213 = vmatprep.subr.bf16.mxu0 0
    %214 = vmatpush1.bf16.msra.mxu0 0
    %215 = vmatprep.subr.bf16.mxu0 0
    %216 = vmatpush1.bf16.msra.mxu0 0
    %217 = vmatprep.subr.bf16.mxu0 0
    %218 = vmatpush1.bf16.msra.mxu0 0
    %219 = vmatprep.subr.bf16.mxu0 0
    %220 = vmatpush1.bf16.msra.mxu0 0
    %221 = vmatprep.subr.bf16.mxu0 0
    %222 = vmatpush1.bf16.msra.mxu0 0
    %223 = vmatprep.subr.bf16.mxu0 0
    %224 = vmatpush1.bf16.msra.mxu0 0
    %225 = vmatprep.subr.bf16.mxu0 0
    %226 = vmatpush1.bf16.msra.mxu0 0
    %227 = vmatprep.subr.bf16.mxu0 0
    %228 = vmatpush1.bf16.msra.mxu0 0
    %229 = vmatprep.subr.bf16.mxu0 0
    %230 = vmatpush1.bf16.msra.mxu0 0
    %231 = vmatprep.mubr.bf16.mxu0 0
    %232 = vmatmul.mubr.bf16.gmra.mrb[0].mxu0 %v197
    %v233 = vpop.f32.mrb[0].mxu0
    %v234 = vadd.f32 %v188, %v233
    %v235 = vpop.f32.mrb[0].mxu0
    %v236 = vpop.f32.mrb[0].mxu0
    %v237 = vadd.f32 %v188, %v236
    %v238 = vpop.f32.mrb[0].mxu0
    %239 = vdwg.mxu0
    %v240 = vmax.f32 %v234, 0.0
    %v241 = vmax.f32 %v237, 0.0
    %v242 = vld [vmem:[%s4] sm:$0x1]
    %v243 = vpack.c.bf16 %v241, %v240
    %vm244 = vcmask 130048
    %v246 = vsel %vm244, %v242, 0
    %248 = vmatprep.subr.bf16.mxu0 0
    %249 = vmatpush1.bf16.msra.mxu0 %v243
    %250 = vmatprep.subr.bf16.mxu0 0
    %251 = vmatpush1.bf16.msra.mxu0 0
    %252 = vmatprep.subr.bf16.mxu0 0
    %253 = vmatpush1.bf16.msra.mxu0 0
    %254 = vmatprep.subr.bf16.mxu0 0
    %255 = vmatpush1.bf16.msra.mxu0 0
    %256 = vmatprep.subr.bf16.mxu0 0
    %257 = vmatpush1.bf16.msra.mxu0 0
    %258 = vmatprep.subr.bf16.mxu0 0
    %259 = vmatpush1.bf16.msra.mxu0 0
    %260 = vmatprep.subr.bf16.mxu0 0
    %261 = vmatpush1.bf16.msra.mxu0 0
    %262 = vmatprep.subr.bf16.mxu0 0
    %263 = vmatpush1.bf16.msra.mxu0 0
    %264 = vmatprep.subr.bf16.mxu0 0
    %265 = vmatpush1.bf16.msra.mxu0 0
    %266 = vmatprep.subr.bf16.mxu0 0
    %267 = vmatpush1.bf16.msra.mxu0 0
    %268 = vmatprep.subr.bf16.mxu0 0
    %269 = vmatpush1.bf16.msra.mxu0 0
    %270 = vmatprep.subr.bf16.mxu0 0
    %271 = vmatpush1.bf16.msra.mxu0 0
    %272 = vmatprep.subr.bf16.mxu0 0
    %273 = vmatpush1.bf16.msra.mxu0 0
    %274 = vmatprep.subr.bf16.mxu0 0
    %275 = vmatpush1.bf16.msra.mxu0 0
    %276 = vmatprep.subr.bf16.mxu0 0
    %277 = vmatpush1.bf16.msra.mxu0 0
    %278 = vmatprep.subr.bf16.mxu0 0
    %279 = vmatpush1.bf16.msra.mxu0 0
    %280 = vmatprep.mubr.bf16.mxu0 0
    %281 = vmatmul.mubr.bf16.gmra.mrb[0].mxu0 %v246
    %v282 = vpop.f32.mrb[0].mxu0
    %v283 = vadd.f32 0.0, %v282
    %v284 = vpop.f32.mrb[0].mxu0
    %v285 = vpop.f32.mrb[0].mxu0
    %v286 = vpop.f32.mrb[0].mxu0
    %287 = vdwg.mxu0
    %v288 = vpack.c.bf16 %v283, %v283
    %v289 = vld [vmem:[%s5] sm:$0xf]
    %v290 = vld [vmem:[%s5 + $0x4] sm:$0xf]
    %v291 = vld [vmem:[%s5 + $0x8] sm:$0xf]
    %v292 = vld [vmem:[%s5 + $0xc] sm:$0xf]
    %v293 = vld [vmem:[%s6] sm:$0x1]
    %v295 = vlaneseq
    %v296 = vshrl.u32 %v295, 7
    %v297 = vsub.s32 0, %v296
    %v298 = vrot.slane %v293, %v297
    %v304 = vunpack.c.l.b16 %v289
    %v305 = vunpack.c.l.b16 %v290
    %v306 = vunpack.c.l.b16 %v291
    %v307 = vunpack.c.l.b16 %v292
    %v308 = vpack.c.b16 %v305, %v304
    %v309 = vpack.c.b16 %v307, %v306
    %vm312 = vcmask 261120
    %v314 = vsel %vm312, %v288, 0
    %316 = vmatprep.subr.bf16.mxu0 0
    %317 = vmatpush1.bf16.msra.mxu0 %v308
    %318 = vmatprep.subr.bf16.mxu0 0
    %319 = vmatpush1.bf16.msra.mxu0 %v309
    %320 = vmatprep.subr.bf16.mxu0 0
    %321 = vmatpush1.bf16.msra.mxu0 0
    %322 = vmatprep.subr.bf16.mxu0 0
    %323 = vmatpush1.bf16.msra.mxu0 0
    %324 = vmatprep.subr.bf16.mxu0 0
    %325 = vmatpush1.bf16.msra.mxu0 0
    %326 = vmatprep.subr.bf16.mxu0 0
    %327 = vmatpush1.bf16.msra.mxu0 0
    %328 = vmatprep.subr.bf16.mxu0 0
    %329 = vmatpush1.bf16.msra.mxu0 0
    %330 = vmatprep.subr.bf16.mxu0 0
    %331 = vmatpush1.bf16.msra.mxu0 0
    %332 = vmatprep.subr.bf16.mxu0 0
    %333 = vmatpush1.bf16.msra.mxu0 0
    %334 = vmatprep.subr.bf16.mxu0 0
    %335 = vmatpush1.bf16.msra.mxu0 0
    %336 = vmatprep.subr.bf16.mxu0 0
    %337 = vmatpush1.bf16.msra.mxu0 0
    %338 = vmatprep.subr.bf16.mxu0 0
    %339 = vmatpush1.bf16.msra.mxu0 0
    %340 = vmatprep.subr.bf16.mxu0 0
    %341 = vmatpush1.bf16.msra.mxu0 0
    %342 = vmatprep.subr.bf16.mxu0 0
    %343 = vmatpush1.bf16.msra.mxu0 0
    %344 = vmatprep.subr.bf16.mxu0 0
    %345 = vmatpush1.bf16.msra.mxu0 0
    %346 = vmatprep.subr.bf16.mxu0 0
    %347 = vmatpush1.bf16.msra.mxu0 0
    %348 = vmatprep.mubr.bf16.mxu0 0
    %349 = vmatmul.mubr.bf16.gmra.mrb[0].mxu0 %v314
    %v350 = vpop.f32.mrb[0].mxu0
    %v351 = vadd.f32 %v298, %v350
    %v352 = vpop.f32.mrb[0].mxu0
    %v353 = vpop.f32.mrb[0].mxu0
    %v354 = vpop.f32.mrb[0].mxu0
    %355 = vdwg.mxu0
    %vm356 = vcmask 25600
    %357 = vst.msk [vmem:[#allocation2] sm:$0x3] %vm356, %v351
    // Predicated region
    $region30: #{tpu_custom_call.1} parent=1 // pred_check
      _
    $region31: #{tpu_custom_call.1} parent=1 // pred_check_branch
      %359 = sbr.rel (0) target = $region33
    $region32: #{tpu_custom_call.1} parent=1 // pred_region
      %s361 = ssub.s32 32, 32
      %362 = vsyncadd [#allocation3], %s361
      %s364 = sshll.u32 [#allocation2], 4
      %s365 = int_to_ptr.vmem [resolvable:$true] %s364
      %367 = dma.vmem_to_hbm [thread:$0]  %s365, 32, %s7, [#allocation3]
    $region33: #{tpu_custom_call.1} parent=1 // pred_fallthru
      _
    // Predicated region
    $region34: #{tpu_custom_call.1} parent=1 // pred_check
      _
    $region35: #{tpu_custom_call.1} parent=1 // pred_check_branch
      %369 = sbr.rel (0) target = $region37
    $region36: #{tpu_custom_call.1} parent=1 // pred_region
      %370 = dma.done [#allocation3], 32
    $region37: #{tpu_custom_call.1} parent=1 // pred_fallthru
      _
    %371 = vsyncpa [#allocation3], 1

</llo_original>
